<compile_context>
chip_gen: v7x
topology: tpu7x:2x2x1
jax: 0.10.0
libtpu: 0.0.40
codegen_flags: <defaults>
</compile_context>

<pallas_src>
from typing import Optional, Tuple

import jax
import jax.numpy as jnp
from jax.experimental import pallas as pl
from jax.experimental.pallas import tpu as pltpu

LANE = 128
SUBLANE = 8


# ----------------------------------------------------------------------------
# Pallas kernel: for each (chunk, 128) spatial slab,
#   y[co] = relu(b[co] + sum_ci w[ci, co] * x[ci])
# Weights/bias are scalars in SMEM; x/o are dense (channels, rows, 128) tiles.
# ----------------------------------------------------------------------------
def _make_conv1x1_relu_kernel(cin: int, cout: int, tr: int, chunk: int):
    assert tr % chunk == 0
    n_chunks = tr // chunk

    def kernel(w_ref, b_ref, x_ref, o_ref):
        # w_ref: (Cin, Cout) f32 SMEM; b_ref: (Cout,) f32 SMEM
        # x_ref: (Cin, tr, 128) VMEM;  o_ref: (Cout, tr, 128) VMEM
        # Hoist SMEM scalar reads and bias broadcasts out of the chunk loop
        # (JAX does not CSE broadcast_in_dim).
        ws = [[w_ref[ci, co] for ci in range(cin)] for co in range(cout)]
        bias_slabs = [jnp.full((chunk, LANE), b_ref[co], dtype=jnp.float32)
                      for co in range(cout)]
        for c in range(n_chunks):                      # static, fully unrolled
            r0 = c * chunk
            xs = [x_ref[ci, pl.ds(r0, chunk), :].astype(jnp.float32)
                  for ci in range(cin)]
            for co in range(cout):
                acc = bias_slabs[co]
                for ci in range(cin):
                    acc = acc + ws[co][ci] * xs[ci]    # dense VPU mul-add
                # Store each output channel as soon as it is ready
                # (unmasked full-width 128-lane stores).
                o_ref[co, pl.ds(r0, chunk), :] = jnp.maximum(
                    acc, 0.0).astype(o_ref.dtype)

    return kernel


def conv1x1_relu(x_nchw: jax.Array, w: jax.Array, b: jax.Array,
                 *, max_block_rows: int = 128) -> jax.Array:
    """1x1 conv + ReLU. x_nchw: (N, Cin, H, W); w: (Cin, Cout); b: (Cout,)."""
    n, cin, h, wd = x_nchw.shape
    cout = w.shape[1]
    hw = h * wd

    # Number of 128-lane rows the spatial axis occupies.
    rows = pl.cdiv(hw, LANE)
    if rows <= max_block_rows:
        tr = rows                      # full spatial extent per block
        rows_pad = rows
    else:
        tr = max_block_rows            # multiple of 8 (sublane aligned)
        rows_pad = pl.cdiv(rows, tr) * tr
    hw_pad = rows_pad * LANE

    # Free reshape NCHW -> (N, Cin, rows, 128); padding only if H*W is not a
    # multiple of 128 (not the common amoebanet case, and not in this demo).
    x3 = x_nchw.reshape(n, cin, hw)
    if hw_pad != hw:
        # TODO(synk): handle the ragged tail in-kernel with a masked store to
        # avoid this extra pad/slice HBM pass.
        x3 = jnp.pad(x3, ((0, 0), (0, 0), (0, hw_pad - hw)))
    x4 = x3.reshape(n, cin, rows_pad, LANE)

    # Compute chunk: 8 sublane rows (one f32 vreg per channel slab).
    chunk = SUBLANE if tr % SUBLANE == 0 else tr

    kernel = _make_conv1x1_relu_kernel(cin, cout, tr, chunk)
    out4 = pl.pallas_call(
        kernel,
        out_shape=jax.ShapeDtypeStruct((n, cout, rows_pad, LANE), x_nchw.dtype),
        grid_spec=pltpu.PrefetchScalarGridSpec(
            num_scalar_prefetch=0,
            grid=(n, rows_pad // tr),
            in_specs=[
                pl.BlockSpec(memory_space=pltpu.MemorySpace.SMEM),  # w (Cin, Cout)
                pl.BlockSpec(memory_space=pltpu.MemorySpace.SMEM),  # b (Cout,)
                pl.BlockSpec((pl.Squeezed(), cin, tr, LANE),
                             lambda i, s: (i, 0, s, 0)),
            ],
            out_specs=pl.BlockSpec((pl.Squeezed(), cout, tr, LANE),
                                   lambda i, s: (i, 0, s, 0)),
        ),
        compiler_params=pltpu.CompilerParams(
            dimension_semantics=("parallel", "parallel")),
    )(w.astype(jnp.float32), b.astype(jnp.float32), x4)

    out3 = out4.reshape(n, cout, hw_pad)
    if hw_pad != hw:
        out3 = out3[:, :, :hw]
    return out3.reshape(n, cout, h, wd)


# ----------------------------------------------------------------------------
# InputOne: tuple routing around the wrapped module (pure Python glue)
# ----------------------------------------------------------------------------
class InputOne:
    """Picks one tensor for the underlying module input::
        a -----> a
        b --f--> f(b)
        c -----> c
    """

    def __init__(self, module, i: int, insert: Optional[int] = None):
        self.module = module
        self.i = i
        self.insert = insert

    def __call__(self, tensors: Tuple[jax.Array, ...]) -> Tuple[jax.Array, ...]:
        i = self.i
        inp = tensors[i]
        output = self.module(inp)
        if not isinstance(output, tuple):
            output = (output,)
        if self.insert is None:
            return tensors[:i] + output + tensors[i + 1:]
        return tensors[:self.insert] + output + tensors[self.insert:]


if __name__ == "__main__":
    key = jax.random.PRNGKey(0)
    k_a, k_b, k_c, k_w, k_bias = jax.random.split(key, 5)

    # Small shapes consistent with the module: a tuple of NCHW feature maps.
    N, CIN, H, W = 2, 4, 16, 16
    COUT = 8
    a = jax.random.normal(k_a, (N, CIN, H, W), dtype=jnp.float32)
    b = jax.random.normal(k_b, (N, CIN, H, W), dtype=jnp.float32)
    c = jax.random.normal(k_c, (N, CIN, H, W), dtype=jnp.float32)

    # Deterministic synthetic parameters for the wrapped module
    # (Conv2d(CIN, COUT, kernel_size=1, bias=True) + ReLU).
    w = jax.random.normal(k_w, (CIN, COUT), dtype=jnp.float32) * 0.1
    bias = jax.random.normal(k_bias, (COUT,), dtype=jnp.float32) * 0.1

    wrapped = lambda x: conv1x1_relu(x, w, bias)
    layer = InputOne(wrapped, i=1)  # b --f--> f(b); a, c pass through

    out = layer((a, b, c))
    out = jax.tree_util.tree_map(jax.block_until_ready, out)

    # Sanity checks: routing semantics + numerics vs. plain-JAX reference.
    assert len(out) == 3
    assert out[0].shape == (N, CIN, H, W) and out[2].shape == (N, CIN, H, W)
    assert out[1].shape == (N, COUT, H, W)
    assert bool(jnp.all(out[0] == a)) and bool(jnp.all(out[2] == c))

    ref = jnp.maximum(
        jnp.einsum("nchw,cd->ndhw", b, w) + bias[None, :, None, None], 0.0)
    assert bool(jnp.allclose(out[1], ref, atol=1e-5, rtol=1e-5))

    print("KERNEL_OK")
</pallas_src>

<mosaic_0001>
module attributes {stable_mosaic.version = 11 : i64} {
  func.func @kernel(%arg0: i32, %arg1: i32, %arg2: memref<4x8xf32, #tpu.memory_space<smem>>, %arg3: memref<8xf32, #tpu.memory_space<smem>>, %arg4: memref<1x4x2x128xf32, #tpu.memory_space<vmem>>, %arg5: memref<1x8x2x128xf32, #tpu.memory_space<vmem>>) attributes {dimension_semantics = [#tpu.dimension_semantics<parallel>, #tpu.dimension_semantics<parallel>], iteration_bounds = array<i64: 2, 1>, scalar_prefetch = 0 : i64, scratch_operands = 0 : i64, tpu.core_type = #tpu.core_type<tc>, window_params = [{transform_indices = @transform_0, window_bounds = array<i64: 4, 8>}, {transform_indices = @transform_1, window_bounds = array<i64: 8>}, {transform_indices = @transform_2, window_bounds = array<i64: 1, 4, 2, 128>}, {transform_indices = @transform_3, window_bounds = array<i64: 1, 8, 2, 128>}]} {
    %c0 = arith.constant 0 : index
    %c0_0 = arith.constant 0 : index
    %0 = memref.load %arg2[%c0, %c0_0] : memref<4x8xf32, #tpu.memory_space<smem>>
    %c1 = arith.constant 1 : index
    %c0_1 = arith.constant 0 : index
    %1 = memref.load %arg2[%c1, %c0_1] : memref<4x8xf32, #tpu.memory_space<smem>>
    %c2 = arith.constant 2 : index
    %c0_2 = arith.constant 0 : index
    %2 = memref.load %arg2[%c2, %c0_2] : memref<4x8xf32, #tpu.memory_space<smem>>
    %c3 = arith.constant 3 : index
    %c0_3 = arith.constant 0 : index
    %3 = memref.load %arg2[%c3, %c0_3] : memref<4x8xf32, #tpu.memory_space<smem>>
    %c0_4 = arith.constant 0 : index
    %c1_5 = arith.constant 1 : index
    %4 = memref.load %arg2[%c0_4, %c1_5] : memref<4x8xf32, #tpu.memory_space<smem>>
    %c1_6 = arith.constant 1 : index
    %c1_7 = arith.constant 1 : index
    %5 = memref.load %arg2[%c1_6, %c1_7] : memref<4x8xf32, #tpu.memory_space<smem>>
    %c2_8 = arith.constant 2 : index
    %c1_9 = arith.constant 1 : index
    %6 = memref.load %arg2[%c2_8, %c1_9] : memref<4x8xf32, #tpu.memory_space<smem>>
    %c3_10 = arith.constant 3 : index
    %c1_11 = arith.constant 1 : index
    %7 = memref.load %arg2[%c3_10, %c1_11] : memref<4x8xf32, #tpu.memory_space<smem>>
    %c0_12 = arith.constant 0 : index
    %c2_13 = arith.constant 2 : index
    %8 = memref.load %arg2[%c0_12, %c2_13] : memref<4x8xf32, #tpu.memory_space<smem>>
    %c1_14 = arith.constant 1 : index
    %c2_15 = arith.constant 2 : index
    %9 = memref.load %arg2[%c1_14, %c2_15] : memref<4x8xf32, #tpu.memory_space<smem>>
    %c2_16 = arith.constant 2 : index
    %c2_17 = arith.constant 2 : index
    %10 = memref.load %arg2[%c2_16, %c2_17] : memref<4x8xf32, #tpu.memory_space<smem>>
    %c3_18 = arith.constant 3 : index
    %c2_19 = arith.constant 2 : index
    %11 = memref.load %arg2[%c3_18, %c2_19] : memref<4x8xf32, #tpu.memory_space<smem>>
    %c0_20 = arith.constant 0 : index
    %c3_21 = arith.constant 3 : index
    %12 = memref.load %arg2[%c0_20, %c3_21] : memref<4x8xf32, #tpu.memory_space<smem>>
    %c1_22 = arith.constant 1 : index
    %c3_23 = arith.constant 3 : index
    %13 = memref.load %arg2[%c1_22, %c3_23] : memref<4x8xf32, #tpu.memory_space<smem>>
    %c2_24 = arith.constant 2 : index
    %c3_25 = arith.constant 3 : index
    %14 = memref.load %arg2[%c2_24, %c3_25] : memref<4x8xf32, #tpu.memory_space<smem>>
    %c3_26 = arith.constant 3 : index
    %c3_27 = arith.constant 3 : index
    %15 = memref.load %arg2[%c3_26, %c3_27] : memref<4x8xf32, #tpu.memory_space<smem>>
    %c0_28 = arith.constant 0 : index
    %c4 = arith.constant 4 : index
    %16 = memref.load %arg2[%c0_28, %c4] : memref<4x8xf32, #tpu.memory_space<smem>>
    %c1_29 = arith.constant 1 : index
    %c4_30 = arith.constant 4 : index
    %17 = memref.load %arg2[%c1_29, %c4_30] : memref<4x8xf32, #tpu.memory_space<smem>>
    %c2_31 = arith.constant 2 : index
    %c4_32 = arith.constant 4 : index
    %18 = memref.load %arg2[%c2_31, %c4_32] : memref<4x8xf32, #tpu.memory_space<smem>>
    %c3_33 = arith.constant 3 : index
    %c4_34 = arith.constant 4 : index
    %19 = memref.load %arg2[%c3_33, %c4_34] : memref<4x8xf32, #tpu.memory_space<smem>>
    %c0_35 = arith.constant 0 : index
    %c5 = arith.constant 5 : index
    %20 = memref.load %arg2[%c0_35, %c5] : memref<4x8xf32, #tpu.memory_space<smem>>
    %c1_36 = arith.constant 1 : index
    %c5_37 = arith.constant 5 : index
    %21 = memref.load %arg2[%c1_36, %c5_37] : memref<4x8xf32, #tpu.memory_space<smem>>
    %c2_38 = arith.constant 2 : index
    %c5_39 = arith.constant 5 : index
    %22 = memref.load %arg2[%c2_38, %c5_39] : memref<4x8xf32, #tpu.memory_space<smem>>
    %c3_40 = arith.constant 3 : index
    %c5_41 = arith.constant 5 : index
    %23 = memref.load %arg2[%c3_40, %c5_41] : memref<4x8xf32, #tpu.memory_space<smem>>
    %c0_42 = arith.constant 0 : index
    %c6 = arith.constant 6 : index
    %24 = memref.load %arg2[%c0_42, %c6] : memref<4x8xf32, #tpu.memory_space<smem>>
    %c1_43 = arith.constant 1 : index
    %c6_44 = arith.constant 6 : index
    %25 = memref.load %arg2[%c1_43, %c6_44] : memref<4x8xf32, #tpu.memory_space<smem>>
    %c2_45 = arith.constant 2 : index
    %c6_46 = arith.constant 6 : index
    %26 = memref.load %arg2[%c2_45, %c6_46] : memref<4x8xf32, #tpu.memory_space<smem>>
    %c3_47 = arith.constant 3 : index
    %c6_48 = arith.constant 6 : index
    %27 = memref.load %arg2[%c3_47, %c6_48] : memref<4x8xf32, #tpu.memory_space<smem>>
    %c0_49 = arith.constant 0 : index
    %c7 = arith.constant 7 : index
    %28 = memref.load %arg2[%c0_49, %c7] : memref<4x8xf32, #tpu.memory_space<smem>>
    %c1_50 = arith.constant 1 : index
    %c7_51 = arith.constant 7 : index
    %29 = memref.load %arg2[%c1_50, %c7_51] : memref<4x8xf32, #tpu.memory_space<smem>>
    %c2_52 = arith.constant 2 : index
    %c7_53 = arith.constant 7 : index
    %30 = memref.load %arg2[%c2_52, %c7_53] : memref<4x8xf32, #tpu.memory_space<smem>>
    %c3_54 = arith.constant 3 : index
    %c7_55 = arith.constant 7 : index
    %31 = memref.load %arg2[%c3_54, %c7_55] : memref<4x8xf32, #tpu.memory_space<smem>>
    %c0_56 = arith.constant 0 : index
    %32 = memref.load %arg3[%c0_56] : memref<8xf32, #tpu.memory_space<smem>>
    %33 = vector.broadcast %32 : f32 to vector<2x128xf32>
    %c1_57 = arith.constant 1 : index
    %34 = memref.load %arg3[%c1_57] : memref<8xf32, #tpu.memory_space<smem>>
    %35 = vector.broadcast %34 : f32 to vector<2x128xf32>
    %c2_58 = arith.constant 2 : index
    %36 = memref.load %arg3[%c2_58] : memref<8xf32, #tpu.memory_space<smem>>
    %37 = vector.broadcast %36 : f32 to vector<2x128xf32>
    %c3_59 = arith.constant 3 : index
    %38 = memref.load %arg3[%c3_59] : memref<8xf32, #tpu.memory_space<smem>>
    %39 = vector.broadcast %38 : f32 to vector<2x128xf32>
    %c4_60 = arith.constant 4 : index
    %40 = memref.load %arg3[%c4_60] : memref<8xf32, #tpu.memory_space<smem>>
    %41 = vector.broadcast %40 : f32 to vector<2x128xf32>
    %c5_61 = arith.constant 5 : index
    %42 = memref.load %arg3[%c5_61] : memref<8xf32, #tpu.memory_space<smem>>
    %43 = vector.broadcast %42 : f32 to vector<2x128xf32>
    %c6_62 = arith.constant 6 : index
    %44 = memref.load %arg3[%c6_62] : memref<8xf32, #tpu.memory_space<smem>>
    %45 = vector.broadcast %44 : f32 to vector<2x128xf32>
    %c7_63 = arith.constant 7 : index
    %46 = memref.load %arg3[%c7_63] : memref<8xf32, #tpu.memory_space<smem>>
    %47 = vector.broadcast %46 : f32 to vector<2x128xf32>
    %c0_64 = arith.constant 0 : index
    %c0_65 = arith.constant 0 : index
    %c0_66 = arith.constant 0 : index
    %c0_67 = arith.constant 0 : index
    %48 = vector.load %arg4[%c0_64, %c0_65, %c0_66, %c0_67] : memref<1x4x2x128xf32, #tpu.memory_space<vmem>>, vector<1x1x2x128xf32>
    %49 = vector.shape_cast %48 : vector<1x1x2x128xf32> to vector<2x128xf32>
    %c0_68 = arith.constant 0 : index
    %c1_69 = arith.constant 1 : index
    %c0_70 = arith.constant 0 : index
    %c0_71 = arith.constant 0 : index
    %50 = vector.load %arg4[%c0_68, %c1_69, %c0_70, %c0_71] : memref<1x4x2x128xf32, #tpu.memory_space<vmem>>, vector<1x1x2x128xf32>
    %51 = vector.shape_cast %50 : vector<1x1x2x128xf32> to vector<2x128xf32>
    %c0_72 = arith.constant 0 : index
    %c2_73 = arith.constant 2 : index
    %c0_74 = arith.constant 0 : index
    %c0_75 = arith.constant 0 : index
    %52 = vector.load %arg4[%c0_72, %c2_73, %c0_74, %c0_75] : memref<1x4x2x128xf32, #tpu.memory_space<vmem>>, vector<1x1x2x128xf32>
    %53 = vector.shape_cast %52 : vector<1x1x2x128xf32> to vector<2x128xf32>
    %c0_76 = arith.constant 0 : index
    %c3_77 = arith.constant 3 : index
    %c0_78 = arith.constant 0 : index
    %c0_79 = arith.constant 0 : index
    %54 = vector.load %arg4[%c0_76, %c3_77, %c0_78, %c0_79] : memref<1x4x2x128xf32, #tpu.memory_space<vmem>>, vector<1x1x2x128xf32>
    %55 = vector.shape_cast %54 : vector<1x1x2x128xf32> to vector<2x128xf32>
    %56 = vector.broadcast %0 : f32 to vector<2x128xf32>
    %57 = arith.mulf %56, %49 : vector<2x128xf32>
    %58 = arith.addf %33, %57 : vector<2x128xf32>
    %59 = vector.broadcast %1 : f32 to vector<2x128xf32>
    %60 = arith.mulf %59, %51 : vector<2x128xf32>
    %61 = arith.addf %58, %60 : vector<2x128xf32>
    %62 = vector.broadcast %2 : f32 to vector<2x128xf32>
    %63 = arith.mulf %62, %53 : vector<2x128xf32>
    %64 = arith.addf %61, %63 : vector<2x128xf32>
    %65 = vector.broadcast %3 : f32 to vector<2x128xf32>
    %66 = arith.mulf %65, %55 : vector<2x128xf32>
    %67 = arith.addf %64, %66 : vector<2x128xf32>
    %cst = arith.constant 0.000000e+00 : f32
    %68 = vector.broadcast %cst : f32 to vector<2x128xf32>
    %69 = arith.maximumf %67, %68 : vector<2x128xf32>
    %c0_80 = arith.constant 0 : index
    %c0_81 = arith.constant 0 : index
    %c0_82 = arith.constant 0 : index
    %c0_83 = arith.constant 0 : index
    %70 = vector.load %arg5[%c0_80, %c0_81, %c0_82, %c0_83] : memref<1x8x2x128xf32, #tpu.memory_space<vmem>>, vector<1x1x2x128xf32>
    %71 = vector.shape_cast %70 : vector<1x1x2x128xf32> to vector<2x128xf32>
    %72 = vector.shape_cast %69 : vector<2x128xf32> to vector<1x1x2x128xf32>
    tpu.vector_store %arg5[%c0_80, %c0_81, %c0_82, %c0_83], %72 {strides = array<i32>} : memref<1x8x2x128xf32, #tpu.memory_space<vmem>>, vector<1x1x2x128xf32>,
    %73 = vector.broadcast %4 : f32 to vector<2x128xf32>
    %74 = arith.mulf %73, %49 : vector<2x128xf32>
    %75 = arith.addf %35, %74 : vector<2x128xf32>
    %76 = vector.broadcast %5 : f32 to vector<2x128xf32>
    %77 = arith.mulf %76, %51 : vector<2x128xf32>
    %78 = arith.addf %75, %77 : vector<2x128xf32>
    %79 = vector.broadcast %6 : f32 to vector<2x128xf32>
    %80 = arith.mulf %79, %53 : vector<2x128xf32>
    %81 = arith.addf %78, %80 : vector<2x128xf32>
    %82 = vector.broadcast %7 : f32 to vector<2x128xf32>
    %83 = arith.mulf %82, %55 : vector<2x128xf32>
    %84 = arith.addf %81, %83 : vector<2x128xf32>
    %cst_84 = arith.constant 0.000000e+00 : f32
    %85 = vector.broadcast %cst_84 : f32 to vector<2x128xf32>
    %86 = arith.maximumf %84, %85 : vector<2x128xf32>
    %c0_85 = arith.constant 0 : index
    %c1_86 = arith.constant 1 : index
    %c0_87 = arith.constant 0 : index
    %c0_88 = arith.constant 0 : index
    %87 = vector.load %arg5[%c0_85, %c1_86, %c0_87, %c0_88] : memref<1x8x2x128xf32, #tpu.memory_space<vmem>>, vector<1x1x2x128xf32>
    %88 = vector.shape_cast %87 : vector<1x1x2x128xf32> to vector<2x128xf32>
    %89 = vector.shape_cast %86 : vector<2x128xf32> to vector<1x1x2x128xf32>
    tpu.vector_store %arg5[%c0_85, %c1_86, %c0_87, %c0_88], %89 {strides = array<i32>} : memref<1x8x2x128xf32, #tpu.memory_space<vmem>>, vector<1x1x2x128xf32>,
    %90 = vector.broadcast %8 : f32 to vector<2x128xf32>
    %91 = arith.mulf %90, %49 : vector<2x128xf32>
    %92 = arith.addf %37, %91 : vector<2x128xf32>
    %93 = vector.broadcast %9 : f32 to vector<2x128xf32>
    %94 = arith.mulf %93, %51 : vector<2x128xf32>
    %95 = arith.addf %92, %94 : vector<2x128xf32>
    %96 = vector.broadcast %10 : f32 to vector<2x128xf32>
    %97 = arith.mulf %96, %53 : vector<2x128xf32>
    %98 = arith.addf %95, %97 : vector<2x128xf32>
    %99 = vector.broadcast %11 : f32 to vector<2x128xf32>
    %100 = arith.mulf %99, %55 : vector<2x128xf32>
    %101 = arith.addf %98, %100 : vector<2x128xf32>
    %cst_89 = arith.constant 0.000000e+00 : f32
    %102 = vector.broadcast %cst_89 : f32 to vector<2x128xf32>
    %103 = arith.maximumf %101, %102 : vector<2x128xf32>
    %c0_90 = arith.constant 0 : index
    %c2_91 = arith.constant 2 : index
    %c0_92 = arith.constant 0 : index
    %c0_93 = arith.constant 0 : index
    %104 = vector.load %arg5[%c0_90, %c2_91, %c0_92, %c0_93] : memref<1x8x2x128xf32, #tpu.memory_space<vmem>>, vector<1x1x2x128xf32>
    %105 = vector.shape_cast %104 : vector<1x1x2x128xf32> to vector<2x128xf32>
    %106 = vector.shape_cast %103 : vector<2x128xf32> to vector<1x1x2x128xf32>
    tpu.vector_store %arg5[%c0_90, %c2_91, %c0_92, %c0_93], %106 {strides = array<i32>} : memref<1x8x2x128xf32, #tpu.memory_space<vmem>>, vector<1x1x2x128xf32>,
    %107 = vector.broadcast %12 : f32 to vector<2x128xf32>
    %108 = arith.mulf %107, %49 : vector<2x128xf32>
    %109 = arith.addf %39, %108 : vector<2x128xf32>
    %110 = vector.broadcast %13 : f32 to vector<2x128xf32>
    %111 = arith.mulf %110, %51 : vector<2x128xf32>
    %112 = arith.addf %109, %111 : vector<2x128xf32>
    %113 = vector.broadcast %14 : f32 to vector<2x128xf32>
    %114 = arith.mulf %113, %53 : vector<2x128xf32>
    %115 = arith.addf %112, %114 : vector<2x128xf32>
    %116 = vector.broadcast %15 : f32 to vector<2x128xf32>
    %117 = arith.mulf %116, %55 : vector<2x128xf32>
    %118 = arith.addf %115, %117 : vector<2x128xf32>
    %cst_94 = arith.constant 0.000000e+00 : f32
    %119 = vector.broadcast %cst_94 : f32 to vector<2x128xf32>
    %120 = arith.maximumf %118, %119 : vector<2x128xf32>
    %c0_95 = arith.constant 0 : index
    %c3_96 = arith.constant 3 : index
    %c0_97 = arith.constant 0 : index
    %c0_98 = arith.constant 0 : index
    %121 = vector.load %arg5[%c0_95, %c3_96, %c0_97, %c0_98] : memref<1x8x2x128xf32, #tpu.memory_space<vmem>>, vector<1x1x2x128xf32>
    %122 = vector.shape_cast %121 : vector<1x1x2x128xf32> to vector<2x128xf32>
    %123 = vector.shape_cast %120 : vector<2x128xf32> to vector<1x1x2x128xf32>
    tpu.vector_store %arg5[%c0_95, %c3_96, %c0_97, %c0_98], %123 {strides = array<i32>} : memref<1x8x2x128xf32, #tpu.memory_space<vmem>>, vector<1x1x2x128xf32>,
    %124 = vector.broadcast %16 : f32 to vector<2x128xf32>
    %125 = arith.mulf %124, %49 : vector<2x128xf32>
    %126 = arith.addf %41, %125 : vector<2x128xf32>
    %127 = vector.broadcast %17 : f32 to vector<2x128xf32>
    %128 = arith.mulf %127, %51 : vector<2x128xf32>
    %129 = arith.addf %126, %128 : vector<2x128xf32>
    %130 = vector.broadcast %18 : f32 to vector<2x128xf32>
    %131 = arith.mulf %130, %53 : vector<2x128xf32>
    %132 = arith.addf %129, %131 : vector<2x128xf32>
    %133 = vector.broadcast %19 : f32 to vector<2x128xf32>
    %134 = arith.mulf %133, %55 : vector<2x128xf32>
    %135 = arith.addf %132, %134 : vector<2x128xf32>
    %cst_99 = arith.constant 0.000000e+00 : f32
    %136 = vector.broadcast %cst_99 : f32 to vector<2x128xf32>
    %137 = arith.maximumf %135, %136 : vector<2x128xf32>
    %c0_100 = arith.constant 0 : index
    %c4_101 = arith.constant 4 : index
    %c0_102 = arith.constant 0 : index
    %c0_103 = arith.constant 0 : index
    %138 = vector.load %arg5[%c0_100, %c4_101, %c0_102, %c0_103] : memref<1x8x2x128xf32, #tpu.memory_space<vmem>>, vector<1x1x2x128xf32>
    %139 = vector.shape_cast %138 : vector<1x1x2x128xf32> to vector<2x128xf32>
    %140 = vector.shape_cast %137 : vector<2x128xf32> to vector<1x1x2x128xf32>
    tpu.vector_store %arg5[%c0_100, %c4_101, %c0_102, %c0_103], %140 {strides = array<i32>} : memref<1x8x2x128xf32, #tpu.memory_space<vmem>>, vector<1x1x2x128xf32>,
    %141 = vector.broadcast %20 : f32 to vector<2x128xf32>
    %142 = arith.mulf %141, %49 : vector<2x128xf32>
    %143 = arith.addf %43, %142 : vector<2x128xf32>
    %144 = vector.broadcast %21 : f32 to vector<2x128xf32>
    %145 = arith.mulf %144, %51 : vector<2x128xf32>
    %146 = arith.addf %143, %145 : vector<2x128xf32>
    %147 = vector.broadcast %22 : f32 to vector<2x128xf32>
    %148 = arith.mulf %147, %53 : vector<2x128xf32>
    %149 = arith.addf %146, %148 : vector<2x128xf32>
    %150 = vector.broadcast %23 : f32 to vector<2x128xf32>
    %151 = arith.mulf %150, %55 : vector<2x128xf32>
    %152 = arith.addf %149, %151 : vector<2x128xf32>
    %cst_104 = arith.constant 0.000000e+00 : f32
    %153 = vector.broadcast %cst_104 : f32 to vector<2x128xf32>
    %154 = arith.maximumf %152, %153 : vector<2x128xf32>
    %c0_105 = arith.constant 0 : index
    %c5_106 = arith.constant 5 : index
    %c0_107 = arith.constant 0 : index
    %c0_108 = arith.constant 0 : index
    %155 = vector.load %arg5[%c0_105, %c5_106, %c0_107, %c0_108] : memref<1x8x2x128xf32, #tpu.memory_space<vmem>>, vector<1x1x2x128xf32>
    %156 = vector.shape_cast %155 : vector<1x1x2x128xf32> to vector<2x128xf32>
    %157 = vector.shape_cast %154 : vector<2x128xf32> to vector<1x1x2x128xf32>
    tpu.vector_store %arg5[%c0_105, %c5_106, %c0_107, %c0_108], %157 {strides = array<i32>} : memref<1x8x2x128xf32, #tpu.memory_space<vmem>>, vector<1x1x2x128xf32>,
    %158 = vector.broadcast %24 : f32 to vector<2x128xf32>
    %159 = arith.mulf %158, %49 : vector<2x128xf32>
    %160 = arith.addf %45, %159 : vector<2x128xf32>
    %161 = vector.broadcast %25 : f32 to vector<2x128xf32>
    %162 = arith.mulf %161, %51 : vector<2x128xf32>
    %163 = arith.addf %160, %162 : vector<2x128xf32>
    %164 = vector.broadcast %26 : f32 to vector<2x128xf32>
    %165 = arith.mulf %164, %53 : vector<2x128xf32>
    %166 = arith.addf %163, %165 : vector<2x128xf32>
    %167 = vector.broadcast %27 : f32 to vector<2x128xf32>
    %168 = arith.mulf %167, %55 : vector<2x128xf32>
    %169 = arith.addf %166, %168 : vector<2x128xf32>
    %cst_109 = arith.constant 0.000000e+00 : f32
    %170 = vector.broadcast %cst_109 : f32 to vector<2x128xf32>
    %171 = arith.maximumf %169, %170 : vector<2x128xf32>
    %c0_110 = arith.constant 0 : index
    %c6_111 = arith.constant 6 : index
    %c0_112 = arith.constant 0 : index
    %c0_113 = arith.constant 0 : index
    %172 = vector.load %arg5[%c0_110, %c6_111, %c0_112, %c0_113] : memref<1x8x2x128xf32, #tpu.memory_space<vmem>>, vector<1x1x2x128xf32>
    %173 = vector.shape_cast %172 : vector<1x1x2x128xf32> to vector<2x128xf32>
    %174 = vector.shape_cast %171 : vector<2x128xf32> to vector<1x1x2x128xf32>
    tpu.vector_store %arg5[%c0_110, %c6_111, %c0_112, %c0_113], %174 {strides = array<i32>} : memref<1x8x2x128xf32, #tpu.memory_space<vmem>>, vector<1x1x2x128xf32>,
    %175 = vector.broadcast %28 : f32 to vector<2x128xf32>
    %176 = arith.mulf %175, %49 : vector<2x128xf32>
    %177 = arith.addf %47, %176 : vector<2x128xf32>
    %178 = vector.broadcast %29 : f32 to vector<2x128xf32>
    %179 = arith.mulf %178, %51 : vector<2x128xf32>
    %180 = arith.addf %177, %179 : vector<2x128xf32>
    %181 = vector.broadcast %30 : f32 to vector<2x128xf32>
    %182 = arith.mulf %181, %53 : vector<2x128xf32>
    %183 = arith.addf %180, %182 : vector<2x128xf32>
    %184 = vector.broadcast %31 : f32 to vector<2x128xf32>
    %185 = arith.mulf %184, %55 : vector<2x128xf32>
    %186 = arith.addf %183, %185 : vector<2x128xf32>
    %cst_114 = arith.constant 0.000000e+00 : f32
    %187 = vector.broadcast %cst_114 : f32 to vector<2x128xf32>
    %188 = arith.maximumf %186, %187 : vector<2x128xf32>
    %c0_115 = arith.constant 0 : index
    %c7_116 = arith.constant 7 : index
    %c0_117 = arith.constant 0 : index
    %c0_118 = arith.constant 0 : index
    %189 = vector.load %arg5[%c0_115, %c7_116, %c0_117, %c0_118] : memref<1x8x2x128xf32, #tpu.memory_space<vmem>>, vector<1x1x2x128xf32>
    %190 = vector.shape_cast %189 : vector<1x1x2x128xf32> to vector<2x128xf32>
    %191 = vector.shape_cast %188 : vector<2x128xf32> to vector<1x1x2x128xf32>
    tpu.vector_store %arg5[%c0_115, %c7_116, %c0_117, %c0_118], %191 {strides = array<i32>} : memref<1x8x2x128xf32, #tpu.memory_space<vmem>>, vector<1x1x2x128xf32>,
    return
  }
  func.func @transform_0(%arg0: i32, %arg1: i32) -> (i32, i32) {
    %c0_i32 = arith.constant 0 : i32
    %c0_i32_0 = arith.constant 0 : i32
    %c0_i32_1 = arith.constant 0 : i32
    return %c0_i32, %c0_i32_0 : i32, i32
  }
  func.func @transform_1(%arg0: i32, %arg1: i32) -> i32 {
    %c0_i32 = arith.constant 0 : i32
    %c0_i32_0 = arith.constant 0 : i32
    return %c0_i32 : i32
  }
  func.func @transform_2(%arg0: i32, %arg1: i32) -> (i32, i32, i32, i32) {
    %c0_i32 = arith.constant 0 : i32
    %c0_i32_0 = arith.constant 0 : i32
    %c0_i32_1 = arith.constant 0 : i32
    return %arg0, %c0_i32, %arg1, %c0_i32_0 : i32, i32, i32, i32
  }
  func.func @transform_3(%arg0: i32, %arg1: i32) -> (i32, i32, i32, i32) {
    %c0_i32 = arith.constant 0 : i32
    %c0_i32_0 = arith.constant 0 : i32
    %c0_i32_1 = arith.constant 0 : i32
    return %arg0, %c0_i32, %arg1, %c0_i32_0 : i32, i32, i32, i32
  }
}

</mosaic_0001>

<llo_original>
// kernel: tpu_custom_call.1
$region0: #{tpu_custom_call.1}
  #allocation0 [shape = 'u32[]', space=smem, size = 0x4, offset = 0x4, fixed_abs, tag = 'smem constant byte address 0x4 - core index']
  #allocation1 [shape = 'u32[144,128]{1,0:T(1,128)}', space=vmem, size = 0x12000, scoped, tag = 'internal scratch']
  %s0 = inlined_call_operand.hbm [shape: f32[4,8], index: 0, kind: input, shape index: {}]
  %s1 = inlined_call_operand.vmem [shape: f32[8], index: 1, kind: input, shape index: {}]
  %s2 = inlined_call_operand.hbm [shape: f32[2,4,2,128], index: 2, kind: input, shape index: {}]
  %s3 = inlined_call_operand.hbm [shape: f32[2,8,2,128], index: 3, kind: output, shape index: {}]
  %s4 = sld [smem:[#allocation0]]
  $region57: #{tpu_custom_call.1} parent=0
    _
  %s6 = ssub.s32 1, %s4
  %s7 = scalar_select 0, %s6, %s4
  $region1: #{tpu_custom_call.1} parent=0
    #allocation2 [shape = 'u8[2048]{0}', space=smem, size = 0x800, scoped, tag = 'input window, operand 0, single buffered']
    #allocation3 [shape = 's32[2]{0}', space=sflag, size = 0x8, scoped, tag = 'scoped memory for tpu_custom_call.1']
    #allocation4 [shape = 's32[2]{0}', space=sflag, size = 0x8, scoped, tag = 'scoped memory for tpu_custom_call.1']
    #allocation5 [shape = 's32[2]{0}', space=sflag, size = 0x8, scoped, tag = 'scoped memory for tpu_custom_call.1']
    #allocation6 [shape = 's32[2]{0}', space=sflag, size = 0x8, scoped, tag = 'scoped memory for tpu_custom_call.1']
    #allocation7 [shape = 'u8[512]{0}', space=smem, size = 0x200, scoped, tag = 'input window, operand 1, single buffered']
    #allocation8 [shape = 'u8[8192]{0}', space=vmem, size = 0x2000, scoped, tag = 'input window, operand 2']
    #allocation9 [shape = 'u8[16384]{0}', space=vmem, size = 0x4000, scoped, tag = 'output window, operand 0']
    %8 = vsyncpa [#allocation5], 0
    %9 = vsyncpa [#allocation6], 0
    %10 = vsyncpa [#allocation3], 0
    %s11 = scalar_lea.sflag [#allocation3], 1
    %12 = vsyncpa %s11, 0
    %13 = vsyncpa [#allocation4], 0
    %s14 = scalar_lea.sflag [#allocation4], 1
    %15 = vsyncpa %s14, 0
    loop: start=0, step=1, limit=4
    $region2: #{tpu_custom_call.1} parent=1 // loop_pre_header
      _
    $region3: #{tpu_custom_call.1} parent=1 // loop_header
      %s17 = sphi 0, %s21
      %p18 = scmp.ge.s32.totalorder %s17, 4
      %s24 = sphi 0, %s36
      %s25 = sphi 0, %s32
      %s26 = sphi 0, %s24
      %s27 = sphi 0, %s25
      %s28 = sphi 0, %s26
      %s29 = sphi 0, %s27
      %s37 = sphi 0, %s37
      %s39 = sphi 0, %s37
      %s40 = sphi 0, %s39
      %s54 = sphi 0, %s40
      %s58 = sphi 0, %s58
      %s60 = sphi 0, %s58
      %s61 = sphi 0, %s60
      %s75 = sphi 0, %s61
      %s83 = sphi 0, %s85
      %s86 = sphi 0, %s83
      %s87 = sphi 0, %s86
      %s103 = sphi 0, %s87
      %s111 = sphi 0, %s113
      %s114 = sphi 0, %s111
      %s115 = sphi 0, %s114
      %s131 = sphi 0, %s115
    $region4: #{tpu_custom_call.1} parent=1 // loop_header_branch
      %20 = sbr.rel (%p18) target = $region8
    $region5: #{tpu_custom_call.1} parent=1 // loop_body
      %s22 = ssub.s32 %s17, 1
      %s23 = ssub.s32 %s17, 2
      %s30 = sadd.s32 1, %s25
      %p31 = scmp.ge.s32.totalorder %s30, 1
      %s32 = scalar_select %p31, 0, %s30
      %s33 = sadd.s32 1, %s24
      %s34 = scalar_select %p31, %s33, %s24
      %p35 = scmp.ge.s32.totalorder %s34, 2
      %s36 = scalar_select %p35, 0, %s34
      %s38 = sadd.s32 %s37, 1
      %p41 = scmp.eq.s32.totalorder %s17, 1
      %p42 = scmp.ne.s32.totalorder %s37, %s39
      %p43 = scmp.eq.s32.totalorder %s17, 0
      %p44 = por %p42, %p43
      %p45 = scmp.ne.s32.totalorder %s37, %s39
      %p46 = scmp.eq.s32.totalorder %s22, 1
      %p47 = por %p45, %p46
      %p48 = scmp.ne.s32.totalorder %s39, %s40
      %p49 = scmp.eq.s32.totalorder %s22, 0
      %p50 = por %p48, %p49
      %p51 = scmp.ne.s32.totalorder %s39, %s40
      %p52 = scmp.eq.s32.totalorder %s23, 1
      %p53 = por %p51, %p52
      %p55 = scmp.ne.s32.totalorder %s40, %s54
      %p56 = scmp.eq.s32.totalorder %s23, 0
      %p57 = por %p55, %p56
      %s59 = sadd.s32 %s58, 1
      %p62 = scmp.eq.s32.totalorder %s17, 1
      %p63 = scmp.ne.s32.totalorder %s58, %s60
      %p64 = scmp.eq.s32.totalorder %s17, 0
      %p65 = por %p63, %p64
      %p66 = scmp.ne.s32.totalorder %s58, %s60
      %p67 = scmp.eq.s32.totalorder %s22, 1
      %p68 = por %p66, %p67
      %p69 = scmp.ne.s32.totalorder %s60, %s61
      %p70 = scmp.eq.s32.totalorder %s22, 0
      %p71 = por %p69, %p70
      %p72 = scmp.ne.s32.totalorder %s60, %s61
      %p73 = scmp.eq.s32.totalorder %s23, 1
      %p74 = por %p72, %p73
      %p76 = scmp.ne.s32.totalorder %s61, %s75
      %p77 = scmp.eq.s32.totalorder %s23, 0
      %p78 = por %p76, %p77
      %s79 = ssub.s32 %s24, %s36
      %s80 = ssub.s32 %s25, %s32
      %s81 = sor.u32 %s79, %s80
      %p82 = scmp.eq.s32.totalorder %s81, 0
      %s84 = sadd.s32 %s83, 1
      %s85 = scalar_select %p82, %s83, %s84
      %p88 = pneg %p82
      %p89 = scmp.eq.s32.totalorder %s17, 1
      %p90 = por %p88, %p89
      %p91 = scmp.ne.s32.totalorder %s83, %s86
      %p92 = scmp.eq.s32.totalorder %s17, 0
      %p93 = por %p91, %p92
      %p94 = scmp.ne.s32.totalorder %s83, %s86
      %p95 = scmp.eq.s32.totalorder %s22, 1
      %p96 = por %p94, %p95
      %p97 = scmp.ne.s32.totalorder %s86, %s87
      %p98 = scmp.eq.s32.totalorder %s22, 0
      %p99 = por %p97, %p98
      %p100 = scmp.ne.s32.totalorder %s86, %s87
      %p101 = scmp.eq.s32.totalorder %s23, 1
      %p102 = por %p100, %p101
      %p104 = scmp.ne.s32.totalorder %s87, %s103
      %p105 = scmp.eq.s32.totalorder %s23, 0
      %p106 = por %p104, %p105
      %s107 = ssub.s32 %s24, %s36
      %s108 = ssub.s32 %s25, %s32
      %s109 = sor.u32 %s107, %s108
      %p110 = scmp.eq.s32.totalorder %s109, 0
      %s112 = sadd.s32 %s111, 1
      %s113 = scalar_select %p110, %s111, %s112
      %p116 = pneg %p110
      %p117 = scmp.eq.s32.totalorder %s17, 1
      %p118 = por %p116, %p117
      %p119 = scmp.ne.s32.totalorder %s111, %s114
      %p120 = scmp.eq.s32.totalorder %s17, 0
      %p121 = por %p119, %p120
      %p122 = scmp.ne.s32.totalorder %s111, %s114
      %p123 = scmp.eq.s32.totalorder %s22, 1
      %p124 = por %p122, %p123
      %p125 = scmp.ne.s32.totalorder %s114, %s115
      %p126 = scmp.eq.s32.totalorder %s22, 0
      %p127 = por %p125, %p126
      %p128 = scmp.ne.s32.totalorder %s114, %s115
      %p129 = scmp.eq.s32.totalorder %s23, 1
      %p130 = por %p128, %p129
      %p132 = scmp.ne.s32.totalorder %s115, %s131
      %p133 = scmp.eq.s32.totalorder %s23, 0
      %p134 = por %p132, %p133
      %p135 = scmp.le.s32.totalorder 1, %s17
      %p136 = scmp.lt.s32.totalorder %s17, 3
      %p137 = pnand %p135, %p136
      %p138 = pneg %p137
      // Predicated region
      $region9: #{tpu_custom_call.1} parent=5 // pred_check
        _
      $region10: #{tpu_custom_call.1} parent=5 // pred_check_branch
        %140 = sbr.rel (%p137) target = $region12
      $region11: #{tpu_custom_call.1} parent=5 // pred_region
        %s141 = ssub.s32 %s17, 1
        // Predicated region
        $region13: #{tpu_custom_call.1} parent=11 // pred_check
          %p142 = pneg %p50
        $region14: #{tpu_custom_call.1} parent=11 // pred_check_branch
          %144 = sbr.rel (%p142) target = $region16
        $region15: #{tpu_custom_call.1} parent=11 // pred_region
          %s146 = ssub.s32 64, 64
          %147 = vsyncadd [#allocation5], %s146
          %150 = dma.hbm_to_smem %s0, 64, [#allocation2], [#allocation5]
        $region16: #{tpu_custom_call.1} parent=11 // pred_fallthru
          _
        // Predicated region
        $region17: #{tpu_custom_call.1} parent=11 // pred_check
          %p151 = pneg %p71
        $region18: #{tpu_custom_call.1} parent=11 // pred_check_branch
          %153 = sbr.rel (%p151) target = $region20
        $region19: #{tpu_custom_call.1} parent=11 // pred_region
          %s155 = ssub.s32 16, 16
          %156 = vsyncadd [#allocation6], %s155
          %s158 = sshll.u32 %s1, 4
          %s159 = int_to_ptr.vmem [resolvable:$true] %s158
          %161 = dma.vmem_to_smem %s159, 16, [#allocation7], [#allocation6]
        $region20: #{tpu_custom_call.1} parent=11 // pred_fallthru
          _
      $region12: #{tpu_custom_call.1} parent=5 // pred_fallthru
        _
      %p162 = scmp.lt.s32.totalorder %s17, 2
      // Predicated region
      $region21: #{tpu_custom_call.1} parent=5 // pred_check
        %p163 = pneg %p162
      $region22: #{tpu_custom_call.1} parent=5 // pred_check_branch
        %165 = sbr.rel (%p163) target = $region24
      $region23: #{tpu_custom_call.1} parent=5 // pred_region
        // Predicated region
        $region25: #{tpu_custom_call.1} parent=23 // pred_check
          %p166 = pneg %p93
        $region26: #{tpu_custom_call.1} parent=23 // pred_check_branch
          %168 = sbr.rel (%p166) target = $region28
        $region27: #{tpu_custom_call.1} parent=23 // pred_region
          %s169 = sand.u32 %s83, 1
          %s170 = scalar_lea.sflag [#allocation3], %s169
          %s171 = sand.u32 %s83, 1
          %s172 = smul.addr %s171, 8
          %s173 = scalar_lea.vmem [#allocation8], %s172
          %s175 = ssub.s32 128, 128
          %176 = vsyncadd %s170, %s175
          %s177 = smul.addr %s24, 4
          %s178 = sadd.s32 %s25, %s177
          %s179 = smul.addr %s178, 32
          %s180 = scalar_lea.hbm %s2, %s179
          %s181 = sshll.u32 %s173, 4
          %s182 = int_to_ptr.vmem [resolvable:$true] %s181
          %187 = dma.hbm_to_vmem [thread:$0]  %s180, 128, %s182, %s170, 32, 32, 2
        $region28: #{tpu_custom_call.1} parent=23 // pred_fallthru
          _
      $region24: #{tpu_custom_call.1} parent=5 // pred_fallthru
        _
      %p188 = scmp.le.s32.totalorder 1, %s17
      %p189 = scmp.lt.s32.totalorder %s17, 3
      %p190 = pnand %p188, %p189
      %p191 = pneg %p190
      // Predicated region
      $region29: #{tpu_custom_call.1} parent=5 // pred_check
        _
      $region30: #{tpu_custom_call.1} parent=5 // pred_check_branch
        %193 = sbr.rel (%p190) target = $region32
      $region31: #{tpu_custom_call.1} parent=5 // pred_region
        %s194 = ssub.s32 %s17, 1
        // Predicated region
        $region33: #{tpu_custom_call.1} parent=31 // pred_check
          %p195 = pneg %p50
        $region34: #{tpu_custom_call.1} parent=31 // pred_check_branch
          %197 = sbr.rel (%p195) target = $region36
        $region35: #{tpu_custom_call.1} parent=31 // pred_region
          %198 = dma.done [#allocation5], 64
        $region36: #{tpu_custom_call.1} parent=31 // pred_fallthru
          _
        // Predicated region
        $region37: #{tpu_custom_call.1} parent=31 // pred_check
          %p199 = pneg %p71
        $region38: #{tpu_custom_call.1} parent=31 // pred_check_branch
          %201 = sbr.rel (%p199) target = $region40
        $region39: #{tpu_custom_call.1} parent=31 // pred_region
          %202 = dma.done [#allocation6], 16
        $region40: #{tpu_custom_call.1} parent=31 // pred_fallthru
          _
        %s203 = sand.u32 %s86, 1
        %s204 = scalar_lea.sflag [#allocation3], %s203
        %s205 = sand.u32 %s86, 1
        %s206 = smul.addr %s205, 8
        %s207 = scalar_lea.vmem [#allocation8], %s206
        // Predicated region
        $region41: #{tpu_custom_call.1} parent=31 // pred_check
          %p208 = pneg %p99
        $region42: #{tpu_custom_call.1} parent=31 // pred_check_branch
          %210 = sbr.rel (%p208) target = $region44
        $region43: #{tpu_custom_call.1} parent=31 // pred_region
          %211 = dma.done %s204, 128
        $region44: #{tpu_custom_call.1} parent=31 // pred_fallthru
          _
        %212 = sfence
        %p213 = pneg %p50
        %p214 = pneg %p47
        %p215 = pneg %p71
        %p216 = pneg %p68
        %s217 = sand.u32 %s86, 1
        %s218 = scalar_lea.sflag [#allocation3], %s217
        %s219 = sand.u32 %s86, 1
        %s220 = smul.addr %s219, 8
        %s221 = scalar_lea.vmem [#allocation8], %s220
        %p222 = pneg %p99
        %p223 = pneg %p96
        %p224 = pneg %p127
        %p225 = pneg %p124
        %s226 = sand.u32 %s114, 1
        %s227 = scalar_lea.sflag [#allocation4], %s226
        %s228 = sand.u32 %s114, 1
        %s229 = smul.addr %s228, 16
        %s230 = scalar_lea.vmem [#allocation9], %s229
        %s231 = sld [smem:[#allocation2]]
        %s232 = sld [smem:[#allocation2 + $0x80]]
        %s233 = sld [smem:[#allocation2 + $0x100]]
        %s234 = sld [smem:[#allocation2 + $0x180]]
        %s235 = sld [smem:[#allocation2 + $0x1]]
        %s236 = sld [smem:[#allocation2 + $0x81]]
        %s237 = sld [smem:[#allocation2 + $0x101]]
        %s238 = sld [smem:[#allocation2 + $0x181]]
        %s239 = sld [smem:[#allocation2 + $0x2]]
        %s240 = sld [smem:[#allocation2 + $0x82]]
        %s241 = sld [smem:[#allocation2 + $0x102]]
        %s242 = sld [smem:[#allocation2 + $0x182]]
        %s243 = sld [smem:[#allocation2 + $0x3]]
        %s244 = sld [smem:[#allocation2 + $0x83]]
        %s245 = sld [smem:[#allocation2 + $0x103]]
        %s246 = sld [smem:[#allocation2 + $0x183]]
        %s247 = sld [smem:[#allocation2 + $0x4]]
        %s248 = sld [smem:[#allocation2 + $0x84]]
        %s249 = sld [smem:[#allocation2 + $0x104]]
        %s250 = sld [smem:[#allocation2 + $0x184]]
        %s251 = sld [smem:[#allocation2 + $0x5]]
        %s252 = sld [smem:[#allocation2 + $0x85]]
        %s253 = sld [smem:[#allocation2 + $0x105]]
        %s254 = sld [smem:[#allocation2 + $0x185]]
        %s255 = sld [smem:[#allocation2 + $0x6]]
        %s256 = sld [smem:[#allocation2 + $0x86]]
        %s257 = sld [smem:[#allocation2 + $0x106]]
        %s258 = sld [smem:[#allocation2 + $0x186]]
        %s259 = sld [smem:[#allocation2 + $0x7]]
        %s260 = sld [smem:[#allocation2 + $0x87]]
        %s261 = sld [smem:[#allocation2 + $0x107]]
        %s262 = sld [smem:[#allocation2 + $0x187]]
        %s263 = sld [smem:[#allocation7]]
        %v264 = vstv %s263
        %s265 = sld [smem:[#allocation7 + $0x1]]
        %v266 = vstv %s265
        %s267 = sld [smem:[#allocation7 + $0x2]]
        %v268 = vstv %s267
        %s269 = sld [smem:[#allocation7 + $0x3]]
        %v270 = vstv %s269
        %s271 = sld [smem:[#allocation7 + $0x4]]
        %v272 = vstv %s271
        %s273 = sld [smem:[#allocation7 + $0x5]]
        %v274 = vstv %s273
        %s275 = sld [smem:[#allocation7 + $0x6]]
        %v276 = vstv %s275
        %s277 = sld [smem:[#allocation7 + $0x7]]
        %v278 = vstv %s277
        %v279 = vld [vmem:[%s207] sm:$0x3]
        %s280 = scalar_lea.vmem %s207, 2 [#allocation8]
        %v281 = vld [vmem:[%s280] sm:$0x3]
        %s282 = scalar_lea.vmem %s207, 4 [#allocation8]
        %v283 = vld [vmem:[%s282] sm:$0x3]
        %s284 = scalar_lea.vmem %s207, 6 [#allocation8]
        %v285 = vld [vmem:[%s284] sm:$0x3]
        %v286 = vstv %s231
        %v287 = vmul.f32 %v286, %v279
        %v288 = vadd.f32 %v264, %v287
        %v289 = vstv %s232
        %v290 = vmul.f32 %v289, %v281
        %v291 = vadd.f32 %v288, %v290
        %v292 = vstv %s233
        %v293 = vmul.f32 %v292, %v283
        %v294 = vadd.f32 %v291, %v293
        %v295 = vstv %s234
        %v296 = vmul.f32 %v295, %v285
        %v297 = vadd.f32 %v294, %v296
        %v298 = vmax.f32 %v297, 0.0
        %299 = vst [vmem:[%s230] sm:$0x3] %v298
        %v300 = vstv %s235
        %v301 = vmul.f32 %v300, %v279
        %v302 = vadd.f32 %v266, %v301
        %v303 = vstv %s236
        %v304 = vmul.f32 %v303, %v281
        %v305 = vadd.f32 %v302, %v304
        %v306 = vstv %s237
        %v307 = vmul.f32 %v306, %v283
        %v308 = vadd.f32 %v305, %v307
        %v309 = vstv %s238
        %v310 = vmul.f32 %v309, %v285
        %v311 = vadd.f32 %v308, %v310
        %v312 = vmax.f32 %v311, 0.0
        %s313 = scalar_lea.vmem %s230, 2 [#allocation9]
        %314 = vst [vmem:[%s313] sm:$0x3] %v312
        %v315 = vstv %s239
        %v316 = vmul.f32 %v315, %v279
        %v317 = vadd.f32 %v268, %v316
        %v318 = vstv %s240
        %v319 = vmul.f32 %v318, %v281
        %v320 = vadd.f32 %v317, %v319
        %v321 = vstv %s241
        %v322 = vmul.f32 %v321, %v283
        %v323 = vadd.f32 %v320, %v322
        %v324 = vstv %s242
        %v325 = vmul.f32 %v324, %v285
        %v326 = vadd.f32 %v323, %v325
        %v327 = vmax.f32 %v326, 0.0
        %s328 = scalar_lea.vmem %s230, 4 [#allocation9]
        %329 = vst [vmem:[%s328] sm:$0x3] %v327
        %v330 = vstv %s243
        %v331 = vmul.f32 %v330, %v279
        %v332 = vadd.f32 %v270, %v331
        %v333 = vstv %s244
        %v334 = vmul.f32 %v333, %v281
        %v335 = vadd.f32 %v332, %v334
        %v336 = vstv %s245
        %v337 = vmul.f32 %v336, %v283
        %v338 = vadd.f32 %v335, %v337
        %v339 = vstv %s246
        %v340 = vmul.f32 %v339, %v285
        %v341 = vadd.f32 %v338, %v340
        %v342 = vmax.f32 %v341, 0.0
        %s343 = scalar_lea.vmem %s230, 6 [#allocation9]
        %344 = vst [vmem:[%s343] sm:$0x3] %v342
        %v345 = vstv %s247
        %v346 = vmul.f32 %v345, %v279
        %v347 = vadd.f32 %v272, %v346
        %v348 = vstv %s248
        %v349 = vmul.f32 %v348, %v281
        %v350 = vadd.f32 %v347, %v349
        %v351 = vstv %s249
        %v352 = vmul.f32 %v351, %v283
        %v353 = vadd.f32 %v350, %v352
        %v354 = vstv %s250
        %v355 = vmul.f32 %v354, %v285
        %v356 = vadd.f32 %v353, %v355
        %v357 = vmax.f32 %v356, 0.0
        %s358 = scalar_lea.vmem %s230, 8 [#allocation9]
        %359 = vst [vmem:[%s358] sm:$0x3] %v357
        %v360 = vstv %s251
        %v361 = vmul.f32 %v360, %v279
        %v362 = vadd.f32 %v274, %v361
        %v363 = vstv %s252
        %v364 = vmul.f32 %v363, %v281
        %v365 = vadd.f32 %v362, %v364
        %v366 = vstv %s253
        %v367 = vmul.f32 %v366, %v283
        %v368 = vadd.f32 %v365, %v367
        %v369 = vstv %s254
        %v370 = vmul.f32 %v369, %v285
        %v371 = vadd.f32 %v368, %v370
        %v372 = vmax.f32 %v371, 0.0
        %s373 = scalar_lea.vmem %s230, 10 [#allocation9]
        %374 = vst [vmem:[%s373] sm:$0x3] %v372
        %v375 = vstv %s255
        %v376 = vmul.f32 %v375, %v279
        %v377 = vadd.f32 %v276, %v376
        %v378 = vstv %s256
        %v379 = vmul.f32 %v378, %v281
        %v380 = vadd.f32 %v377, %v379
        %v381 = vstv %s257
        %v382 = vmul.f32 %v381, %v283
        %v383 = vadd.f32 %v380, %v382
        %v384 = vstv %s258
        %v385 = vmul.f32 %v384, %v285
        %v386 = vadd.f32 %v383, %v385
        %v387 = vmax.f32 %v386, 0.0
        %s388 = scalar_lea.vmem %s230, 12 [#allocation9]
        %389 = vst [vmem:[%s388] sm:$0x3] %v387
        %v390 = vstv %s259
        %v391 = vmul.f32 %v390, %v279
        %v392 = vadd.f32 %v278, %v391
        %v393 = vstv %s260
        %v394 = vmul.f32 %v393, %v281
        %v395 = vadd.f32 %v392, %v394
        %v396 = vstv %s261
        %v397 = vmul.f32 %v396, %v283
        %v398 = vadd.f32 %v395, %v397
        %v399 = vstv %s262
        %v400 = vmul.f32 %v399, %v285
        %v401 = vadd.f32 %v398, %v400
        %v402 = vmax.f32 %v401, 0.0
        %s403 = scalar_lea.vmem %s230, 14 [#allocation9]
        %404 = vst [vmem:[%s403] sm:$0x3] %v402
        %s405 = sand.u32 %s114, 1
        %s406 = scalar_lea.sflag [#allocation4], %s405
        %s407 = sand.u32 %s114, 1
        %s408 = smul.addr %s407, 16
        %s409 = scalar_lea.vmem [#allocation9], %s408
        // Predicated region
        $region45: #{tpu_custom_call.1} parent=31 // pred_check
          %p410 = pneg %p124
        $region46: #{tpu_custom_call.1} parent=31 // pred_check_branch
          %412 = sbr.rel (%p410) target = $region48
        $region47: #{tpu_custom_call.1} parent=31 // pred_region
          %s414 = ssub.s32 256, 256
          %415 = vsyncadd %s406, %s414
          %s416 = smul.addr %s26, 8
          %s417 = sadd.s32 %s27, %s416
          %s418 = smul.addr %s417, 32
          %s419 = scalar_lea.hbm %s3, %s418
          %s420 = sshll.u32 %s409, 4
          %s421 = int_to_ptr.vmem [resolvable:$true] %s420
          %426 = dma.vmem_to_hbm [thread:$0]  %s421, 256, %s419, %s406, 32, 32, 2
        $region48: #{tpu_custom_call.1} parent=31 // pred_fallthru
          _
      $region32: #{tpu_custom_call.1} parent=5 // pred_fallthru
        _
      %p427 = scmp.le.s32.totalorder 2, %s17
      // Predicated region
      $region49: #{tpu_custom_call.1} parent=5 // pred_check
        %p428 = pneg %p427
      $region50: #{tpu_custom_call.1} parent=5 // pred_check_branch
        %430 = sbr.rel (%p428) target = $region52
      $region51: #{tpu_custom_call.1} parent=5 // pred_region
        %s431 = ssub.s32 %s17, 2
        // Predicated region
        $region53: #{tpu_custom_call.1} parent=51 // pred_check
          %p432 = pneg %p130
        $region54: #{tpu_custom_call.1} parent=51 // pred_check_branch
          %434 = sbr.rel (%p432) target = $region56
        $region55: #{tpu_custom_call.1} parent=51 // pred_region
          %s435 = sand.u32 %s115, 1
          %s436 = scalar_lea.sflag [#allocation4], %s435
          %s437 = sand.u32 %s115, 1
          %s438 = smul.addr %s437, 16
          %s439 = scalar_lea.vmem [#allocation9], %s438
          %440 = dma.done %s436, 256
        $region56: #{tpu_custom_call.1} parent=51 // pred_fallthru
          _
      $region52: #{tpu_custom_call.1} parent=5 // pred_fallthru
        _
    $region6: #{tpu_custom_call.1} parent=1 // loop_footer
      %s21 = sadd.s32 1, %s17
    $region7: #{tpu_custom_call.1} parent=1 // loop_footer_branch
      %16 = sbr.rel target = $region3
    $region8: #{tpu_custom_call.1} parent=1 // loop_exit
      _
    %441 = vsyncpa [#allocation3], 1
    %s442 = scalar_lea.sflag [#allocation3], 1
    %443 = vsyncpa %s442, 1
    %444 = vsyncpa [#allocation4], 1
    %s445 = scalar_lea.sflag [#allocation4], 1
    %446 = vsyncpa %s445, 1
    %447 = vsyncpa [#allocation5], 1
    %s448 = scalar_lea.sflag [#allocation5], 1
    %449 = vsyncpa %s448, 1
    %450 = vsyncpa [#allocation6], 1
    %s451 = scalar_lea.sflag [#allocation6], 1
    %452 = vsyncpa %s451, 1

</llo_original>
